<compile_context>
chip_gen: v5e
topology: v5e:2x2
jax: 0.10.0
libtpu: 0.0.40
codegen_flags: <defaults>
</compile_context>

<pallas_src>
import functools

import jax
import jax.numpy as jnp
from jax import lax
from jax.experimental import pallas as pl
from jax.experimental.pallas import tpu as pltpu

LANE = 128
SUBLANE = 8
_MIN_PALLAS_ELEMS = 1 << 16   # below this, launch + epilogue overhead dominates


def _round_up(x, m):
    return ((x + m - 1) // m) * m


@functools.lru_cache(maxsize=None)
def _tpu_config():
    """Return (ncores, tm_max, vmem_limit_bytes) per TPU generation.

    v7x-class chips (64 MiB VMEM per TensorCore, ~3.2 TB/s HBM, 2 TCs) want
    the biggest tiles and the 2-way 'parallel' split; v5e/v6e (128 MiB VMEM,
    one TensorCore) are served by 4096-row tiles and a single-core grid.
    A misdetection only costs performance, never correctness.
    """
    ncores, tm_max, vmem_limit = 1, 4096, 32 << 20
    try:
        info = pltpu.get_tpu_info()
        vmem = int(getattr(info, "vmem_capacity_bytes", 128 << 20))
        if vmem <= (96 << 20):     # v7x-class (64 MiB / TC)
            ncores, tm_max = 2, 8192
    except Exception:
        pass  # conservative default works on every generation
    return ncores, tm_max, vmem_limit


def _make_ccc_kernel(n, tm, chunk, blocks_per_core, needs_mask):
    """Build the per-block partial-moment kernel (all args are static ints/bools)."""
    nchunks = tm // chunk

    def kernel(shift_ref, p_ref, g_ref, acc_ref):
        c = pl.program_id(0)
        i = pl.program_id(1)

        @pl.when(i == 0)
        def _init():
            acc_ref[...] = jnp.zeros_like(acc_ref)

        sp = shift_ref[0]
        sg = shift_ref[1]
        row0 = (c * blocks_per_core + i) * tm   # UNclamped global row of this block

        if needs_mask:
            # Per-chunk element index (hoisted out of the loop; only the scalar
            # limit changes per iteration).
            base_idx = (
                lax.broadcasted_iota(jnp.int32, (chunk, LANE), 0) * LANE
                + lax.broadcasted_iota(jnp.int32, (chunk, LANE), 1)
            )

        def body(j, carry):
            s_a, s_b, s_ab, s_aa, s_bb = carry
            r = pl.multiple_of(j * chunk, chunk)
            # Per-chunk load + upcast: no full-block f32 materialization.
            a = p_ref[pl.ds(r, chunk), :].astype(jnp.float32) - sp
            b = g_ref[pl.ds(r, chunk), :].astype(jnp.float32) - sg
            if needs_mask:
                # Mask off pad / out-of-bounds elements using the true count n.
                limit = n - (row0 + r) * LANE
                valid = base_idx < limit
                a = jnp.where(valid, a, 0.0)
                b = jnp.where(valid, b, 0.0)
            a = a.reshape(-1, SUBLANE, LANE)
            b = b.reshape(-1, SUBLANE, LANE)
            return (
                s_a + jnp.sum(a, axis=0),
                s_b + jnp.sum(b, axis=0),
                s_ab + jnp.sum(a * b, axis=0),
                s_aa + jnp.sum(a * a, axis=0),
                s_bb + jnp.sum(b * b, axis=0),
            )

        zero = jnp.zeros((SUBLANE, LANE), jnp.float32)
        s_a, s_b, s_ab, s_aa, s_bb = lax.fori_loop(
            0, nchunks, body, (zero, zero, zero, zero, zero),
            unroll=(nchunks <= 8))

        acc_ref[0] += s_a
        acc_ref[1] += s_b
        acc_ref[2] += s_ab
        acc_ref[3] += s_aa
        acc_ref[4] += s_bb

    return kernel


def _ccc_from_moments(s_a, s_b, s_ab, s_aa, s_bb, sp, sg, n):
    """Scalar CCC epilogue from shifted raw moments (matches torch semantics)."""
    nf = jnp.float32(n)
    mean_p = sp + s_a / nf
    mean_g = sg + s_b / nf
    # Centered second moments (shift-invariant); clamp for numerical safety.
    svp2 = jnp.maximum(s_aa - s_a * s_a / nf, 0.0)
    svg2 = jnp.maximum(s_bb - s_b * s_b / nf, 0.0)
    svpg = s_ab - s_a * s_b / nf

    cor = svpg / (jnp.sqrt(svp2) * jnp.sqrt(svg2) + 1e-08)
    # torch.var / torch.std default to the unbiased (N - 1) estimator.
    var_p = svp2 / (nf - 1.0)
    var_g = svg2 / (nf - 1.0)
    sd_p = jnp.sqrt(var_p)
    sd_g = jnp.sqrt(var_g)
    numerator = 2.0 * cor * sd_g * sd_p
    denominator = var_p + var_g + (mean_p - mean_g) * (mean_p - mean_g)
    return 1.0 - numerator / (denominator + 1e-08)


def _ccc_ref(prediction, ground_truth):
    """Pure-JAX reference mirroring the PyTorch module exactly (two-pass)."""
    p = prediction.reshape(-1).astype(jnp.float32)
    g = ground_truth.reshape(-1).astype(jnp.float32)
    mean_g = jnp.mean(g)
    mean_p = jnp.mean(p)
    v_p = p - mean_p
    v_g = g - mean_g
    cor = jnp.sum(v_p * v_g) / (
        jnp.sqrt(jnp.sum(v_p**2)) * jnp.sqrt(jnp.sum(v_g**2)) + 1e-08
    )
    n = p.shape[0]
    sd_g = jnp.sqrt(jnp.sum(v_g**2) / (n - 1))
    sd_p = jnp.sqrt(jnp.sum(v_p**2) / (n - 1))
    numerator = 2 * cor * sd_g * sd_p
    denominator = sd_p**2 + sd_g**2 + (mean_p - mean_g) ** 2
    return 1.0 - numerator / (denominator + 1e-08)


@jax.jit
def ccc_loss(prediction, ground_truth):
    # Flatten exactly like `view(-1)`; keep native dtype (kernel upcasts).
    p = prediction.reshape(-1)
    g = ground_truth.reshape(-1)
    n = p.shape[0]

    # Tiny inputs: the fused XLA reduction beats any kernel launch.
    if n < _MIN_PALLAS_ELEMS:
        return _ccc_ref(p, g)

    ncores, tm_max, vmem_limit = _tpu_config()

    # Data-dependent shift (first element of each input) for stable raw-moment
    # accumulation; passed to the kernel through SMEM.
    shifts = jnp.stack([p[0], g[0]]).astype(jnp.float32)

    # Only pad the ragged tail (< 128 elems) when n is not lane-aligned so the
    # flat vector can be viewed as a (rows, 128) slab.  For lane-aligned n (the
    # common case) this is a pure bitcast: zero extra HBM traffic.
    n_aligned = _round_up(n, LANE)
    if n_aligned != n:
        # TODO(synk): a manual-DMA 1-D kernel would avoid this copy for
        # lane-unaligned N; the padded zeros are masked off in-kernel anyway.
        p = jnp.pad(p, (0, n_aligned - n))
        g = jnp.pad(g, (0, n_aligned - n))
    rows = n_aligned // LANE
    p2 = p.reshape(rows, LANE)
    g2 = g.reshape(rows, LANE)

    # Row-tile selection: as large as the generation allows, never padded —
    # ragged coverage is masked in-kernel instead.
    rows_per_core = -(-rows // ncores)
    tm = tm_max if rows_per_core >= tm_max else _round_up(rows_per_core, SUBLANE)
    blocks_per_core = -(-rows // (ncores * tm))
    data_blocks = -(-rows // tm)                      # real blocks (last may be partial)
    covered = ncores * blocks_per_core * tm * LANE
    needs_mask = covered != n                         # static

    chunk = 64 if tm % 64 == 0 else SUBLANE
    chunk = min(chunk, tm)

    kernel = _make_ccc_kernel(n, tm, chunk, blocks_per_core, needs_mask)

    def in_map(c, i):
        blk = c * blocks_per_core + i
        # Clamp over-range blocks back in bounds; they are fully masked anyway.
        return (jnp.minimum(blk, data_blocks - 1), 0)

    partials = pl.pallas_call(
        kernel,
        out_shape=jax.ShapeDtypeStruct((ncores, 5, SUBLANE, LANE), jnp.float32),
        grid=(ncores, blocks_per_core),
        in_specs=[
            pl.BlockSpec(memory_space=pltpu.MemorySpace.SMEM),   # shifts
            pl.BlockSpec((tm, LANE), in_map),                    # prediction
            pl.BlockSpec((tm, LANE), in_map),                    # ground truth
        ],
        out_specs=pl.BlockSpec((None, 5, SUBLANE, LANE), lambda c, i: (c, 0, 0, 0)),
        compiler_params=pltpu.CompilerParams(
            dimension_semantics=("parallel", "arbitrary"),
            vmem_limit_bytes=vmem_limit,
        ),
        cost_estimate=pl.CostEstimate(
            flops=10 * n,
            transcendentals=0,
            bytes_accessed=2 * n * p.dtype.itemsize + ncores * 5 * SUBLANE * LANE * 4,
        ),
    )(shifts, p2, g2)

    # Combine the per-core vreg partials and run the scalar epilogue in JAX.
    sums = jnp.sum(partials, axis=(0, 2, 3))   # (5,)
    return _ccc_from_moments(sums[0], sums[1], sums[2], sums[3], sums[4],
                             shifts[0], shifts[1], n)


if __name__ == "__main__":
    key = jax.random.PRNGKey(0)
    k1, k2 = jax.random.split(key)

    # Main check: lane-aligned size that exercises the Pallas path
    # (2*4*128*128 = 131072 elements), with correlated prediction/target.
    pred = jax.random.normal(k1, (2, 4, 128, 128), dtype=jnp.float32)
    gt = 0.5 * pred + jax.random.normal(k2, (2, 4, 128, 128), dtype=jnp.float32)
    loss = ccc_loss(pred, gt)
    jax.block_until_ready(loss)
    ref = _ccc_ref(pred, gt)
    assert jnp.allclose(loss, ref, atol=1e-4, rtol=1e-4), (loss, ref)

    # Size whose row count does not divide the tile: exercises the in-kernel
    # mask and the chunked inner loop (2*4*100*100 = 80000 elements).
    k3, k4 = jax.random.split(k1)
    pred2 = jax.random.normal(k3, (2, 4, 100, 100), dtype=jnp.float32)
    gt2 = jax.random.normal(k4, (2, 4, 100, 100), dtype=jnp.float32)
    loss2 = ccc_loss(pred2, gt2)
    jax.block_until_ready(loss2)
    ref2 = _ccc_ref(pred2, gt2)
    assert jnp.allclose(loss2, ref2, atol=1e-4, rtol=1e-4), (loss2, ref2)

    # Tiny input (the original example shape): pure-JAX fallback path.
    pred3 = jax.random.normal(k3, (2, 4, 16, 16), dtype=jnp.float32)
    gt3 = jax.random.normal(k4, (2, 4, 16, 16), dtype=jnp.float32)
    loss3 = ccc_loss(pred3, gt3)
    jax.block_until_ready(loss3)
    ref3 = _ccc_ref(pred3, gt3)
    assert jnp.allclose(loss3, ref3, atol=1e-4, rtol=1e-4), (loss3, ref3)

    print("KERNEL_OK")
</pallas_src>

<mosaic_0001>
module attributes {stable_mosaic.version = 11 : i64} {
  func.func @kernel(%arg0: i32, %arg1: i32, %arg2: memref<2xf32, #tpu.memory_space<smem>>, %arg3: memref<1024x128xf32, #tpu.memory_space<vmem>>, %arg4: memref<1024x128xf32, #tpu.memory_space<vmem>>, %arg5: memref<1x5x8x128xf32, #tpu.memory_space<vmem>>) attributes {dimension_semantics = [#tpu.dimension_semantics<parallel>, #tpu.dimension_semantics<arbitrary>], iteration_bounds = array<i64: 1, 1>, scalar_prefetch = 0 : i64, scratch_operands = 0 : i64, tpu.core_type = #tpu.core_type<tc>, window_params = [{transform_indices = @transform_0, window_bounds = array<i64: 2>}, {transform_indices = @transform_1, window_bounds = array<i64: 1024, 128>}, {transform_indices = @transform_2, window_bounds = array<i64: 1024, 128>}, {transform_indices = @transform_3, window_bounds = array<i64: 1, 5, 8, 128>}]} {
    %c0_i32 = arith.constant 0 : i32
    %0 = arith.cmpi eq, %arg1, %c0_i32 : i32
    %1 = arith.extui %0 : i1 to i32
    %c0_i32_0 = arith.constant 0 : i32
    %2 = arith.cmpi ne, %1, %c0_i32_0 : i32
    scf.if %2 {
      %cst_40 = arith.constant 0.000000e+00 : f32
      %38 = vector.broadcast %cst_40 : f32 to vector<5x8x128xf32>
      %c0_41 = arith.constant 0 : index
      %c0_42 = arith.constant 0 : index
      %c0_43 = arith.constant 0 : index
      %c0_44 = arith.constant 0 : index
      %39 = vector.load %arg5[%c0_41, %c0_42, %c0_43, %c0_44] : memref<1x5x8x128xf32, #tpu.memory_space<vmem>>, vector<1x5x8x128xf32>
      %40 = vector.shape_cast %39 : vector<1x5x8x128xf32> to vector<5x8x128xf32>
      %41 = vector.shape_cast %38 : vector<5x8x128xf32> to vector<1x5x8x128xf32>
      tpu.vector_store %arg5[%c0_41, %c0_42, %c0_43, %c0_44], %41 {strides = array<i32>} : memref<1x5x8x128xf32, #tpu.memory_space<vmem>>, vector<1x5x8x128xf32>,
    } else {
    }
    %c0 = arith.constant 0 : index
    %3 = memref.load %arg2[%c0] : memref<2xf32, #tpu.memory_space<smem>>
    %c1 = arith.constant 1 : index
    %4 = memref.load %arg2[%c1] : memref<2xf32, #tpu.memory_space<smem>>
    %cst = arith.constant 0.000000e+00 : f32
    %5 = vector.broadcast %cst : f32 to vector<8x128xf32>
    %c0_i32_1 = arith.constant 0 : i32
    %c16_i32 = arith.constant 16 : i32
    %6 = arith.addi %c0_i32_1, %c16_i32 : i32
    %c1_i32 = arith.constant 1 : i32
    %7:5 = scf.for %arg6 = %c0_i32_1 to %6 step %c1_i32 iter_args(%arg7 = %5, %arg8 = %5, %arg9 = %5, %arg10 = %5, %arg11 = %5) -> (vector<8x128xf32>, vector<8x128xf32>, vector<8x128xf32>, vector<8x128xf32>, vector<8x128xf32>)  : i32 {
      %c64_i32 = arith.constant 64 : i32
      %38 = arith.muli %arg6, %c64_i32 : i32
      %39 = tpu.assume_multiple %38, 64 : i32
      %40 = arith.index_cast %39 : i32 to index
      %c0_40 = arith.constant 0 : index
      %41 = vector.load %arg3[%40, %c0_40] : memref<1024x128xf32, #tpu.memory_space<vmem>>, vector<64x128xf32>
      %42 = vector.broadcast %3 : f32 to vector<64x128xf32>
      %43 = arith.subf %41, %42 : vector<64x128xf32>
      %44 = arith.index_cast %39 : i32 to index
      %c0_41 = arith.constant 0 : index
      %45 = vector.load %arg4[%44, %c0_41] : memref<1024x128xf32, #tpu.memory_space<vmem>>, vector<64x128xf32>
      %46 = vector.broadcast %4 : f32 to vector<64x128xf32>
      %47 = arith.subf %45, %46 : vector<64x128xf32>
      %48 = vector.shape_cast %43 : vector<64x128xf32> to vector<8x8x128xf32>
      %49 = vector.shape_cast %47 : vector<64x128xf32> to vector<8x8x128xf32>
      %cst_42 = arith.constant dense<0.000000e+00> : vector<8x128xf32>
      %50 = vector.multi_reduction <add>, %48, %cst_42 [0] : vector<8x8x128xf32> to vector<8x128xf32>
      %51 = arith.addf %arg7, %50 : vector<8x128xf32>
      %cst_43 = arith.constant dense<0.000000e+00> : vector<8x128xf32>
      %52 = vector.multi_reduction <add>, %49, %cst_43 [0] : vector<8x8x128xf32> to vector<8x128xf32>
      %53 = arith.addf %arg8, %52 : vector<8x128xf32>
      %54 = arith.mulf %48, %49 : vector<8x8x128xf32>
      %cst_44 = arith.constant dense<0.000000e+00> : vector<8x128xf32>
      %55 = vector.multi_reduction <add>, %54, %cst_44 [0] : vector<8x8x128xf32> to vector<8x128xf32>
      %56 = arith.addf %arg9, %55 : vector<8x128xf32>
      %57 = arith.mulf %48, %48 : vector<8x8x128xf32>
      %cst_45 = arith.constant dense<0.000000e+00> : vector<8x128xf32>
      %58 = vector.multi_reduction <add>, %57, %cst_45 [0] : vector<8x8x128xf32> to vector<8x128xf32>
      %59 = arith.addf %arg10, %58 : vector<8x128xf32>
      %60 = arith.mulf %49, %49 : vector<8x8x128xf32>
      %cst_46 = arith.constant dense<0.000000e+00> : vector<8x128xf32>
      %61 = vector.multi_reduction <add>, %60, %cst_46 [0] : vector<8x8x128xf32> to vector<8x128xf32>
      %62 = arith.addf %arg11, %61 : vector<8x128xf32>
      scf.yield %51, %53, %56, %59, %62 : vector<8x128xf32>, vector<8x128xf32>, vector<8x128xf32>, vector<8x128xf32>, vector<8x128xf32>
    }
    %c16_i32_2 = arith.constant 16 : i32
    %c0_3 = arith.constant 0 : index
    %c0_4 = arith.constant 0 : index
    %c0_5 = arith.constant 0 : index
    %c0_6 = arith.constant 0 : index
    %8 = vector.load %arg5[%c0_3, %c0_4, %c0_5, %c0_6] : memref<1x5x8x128xf32, #tpu.memory_space<vmem>>, vector<1x1x8x128xf32>
    %9 = vector.shape_cast %8 : vector<1x1x8x128xf32> to vector<8x128xf32>
    %10 = arith.addf %9, %7#0 : vector<8x128xf32>
    %c0_7 = arith.constant 0 : index
    %c0_8 = arith.constant 0 : index
    %c0_9 = arith.constant 0 : index
    %c0_10 = arith.constant 0 : index
    %11 = vector.load %arg5[%c0_7, %c0_8, %c0_9, %c0_10] : memref<1x5x8x128xf32, #tpu.memory_space<vmem>>, vector<1x1x8x128xf32>
    %12 = vector.shape_cast %11 : vector<1x1x8x128xf32> to vector<8x128xf32>
    %13 = vector.shape_cast %10 : vector<8x128xf32> to vector<1x1x8x128xf32>
    tpu.vector_store %arg5[%c0_7, %c0_8, %c0_9, %c0_10], %13 {strides = array<i32>} : memref<1x5x8x128xf32, #tpu.memory_space<vmem>>, vector<1x1x8x128xf32>,
    %c0_11 = arith.constant 0 : index
    %c1_12 = arith.constant 1 : index
    %c0_13 = arith.constant 0 : index
    %c0_14 = arith.constant 0 : index
    %14 = vector.load %arg5[%c0_11, %c1_12, %c0_13, %c0_14] : memref<1x5x8x128xf32, #tpu.memory_space<vmem>>, vector<1x1x8x128xf32>
    %15 = vector.shape_cast %14 : vector<1x1x8x128xf32> to vector<8x128xf32>
    %16 = arith.addf %15, %7#1 : vector<8x128xf32>
    %c0_15 = arith.constant 0 : index
    %c1_16 = arith.constant 1 : index
    %c0_17 = arith.constant 0 : index
    %c0_18 = arith.constant 0 : index
    %17 = vector.load %arg5[%c0_15, %c1_16, %c0_17, %c0_18] : memref<1x5x8x128xf32, #tpu.memory_space<vmem>>, vector<1x1x8x128xf32>
    %18 = vector.shape_cast %17 : vector<1x1x8x128xf32> to vector<8x128xf32>
    %19 = vector.shape_cast %16 : vector<8x128xf32> to vector<1x1x8x128xf32>
    tpu.vector_store %arg5[%c0_15, %c1_16, %c0_17, %c0_18], %19 {strides = array<i32>} : memref<1x5x8x128xf32, #tpu.memory_space<vmem>>, vector<1x1x8x128xf32>,
    %c0_19 = arith.constant 0 : index
    %c2 = arith.constant 2 : index
    %c0_20 = arith.constant 0 : index
    %c0_21 = arith.constant 0 : index
    %20 = vector.load %arg5[%c0_19, %c2, %c0_20, %c0_21] : memref<1x5x8x128xf32, #tpu.memory_space<vmem>>, vector<1x1x8x128xf32>
    %21 = vector.shape_cast %20 : vector<1x1x8x128xf32> to vector<8x128xf32>
    %22 = arith.addf %21, %7#2 : vector<8x128xf32>
    %c0_22 = arith.constant 0 : index
    %c2_23 = arith.constant 2 : index
    %c0_24 = arith.constant 0 : index
    %c0_25 = arith.constant 0 : index
    %23 = vector.load %arg5[%c0_22, %c2_23, %c0_24, %c0_25] : memref<1x5x8x128xf32, #tpu.memory_space<vmem>>, vector<1x1x8x128xf32>
    %24 = vector.shape_cast %23 : vector<1x1x8x128xf32> to vector<8x128xf32>
    %25 = vector.shape_cast %22 : vector<8x128xf32> to vector<1x1x8x128xf32>
    tpu.vector_store %arg5[%c0_22, %c2_23, %c0_24, %c0_25], %25 {strides = array<i32>} : memref<1x5x8x128xf32, #tpu.memory_space<vmem>>, vector<1x1x8x128xf32>,
    %c0_26 = arith.constant 0 : index
    %c3 = arith.constant 3 : index
    %c0_27 = arith.constant 0 : index
    %c0_28 = arith.constant 0 : index
    %26 = vector.load %arg5[%c0_26, %c3, %c0_27, %c0_28] : memref<1x5x8x128xf32, #tpu.memory_space<vmem>>, vector<1x1x8x128xf32>
    %27 = vector.shape_cast %26 : vector<1x1x8x128xf32> to vector<8x128xf32>
    %28 = arith.addf %27, %7#3 : vector<8x128xf32>
    %c0_29 = arith.constant 0 : index
    %c3_30 = arith.constant 3 : index
    %c0_31 = arith.constant 0 : index
    %c0_32 = arith.constant 0 : index
    %29 = vector.load %arg5[%c0_29, %c3_30, %c0_31, %c0_32] : memref<1x5x8x128xf32, #tpu.memory_space<vmem>>, vector<1x1x8x128xf32>
    %30 = vector.shape_cast %29 : vector<1x1x8x128xf32> to vector<8x128xf32>
    %31 = vector.shape_cast %28 : vector<8x128xf32> to vector<1x1x8x128xf32>
    tpu.vector_store %arg5[%c0_29, %c3_30, %c0_31, %c0_32], %31 {strides = array<i32>} : memref<1x5x8x128xf32, #tpu.memory_space<vmem>>, vector<1x1x8x128xf32>,
    %c0_33 = arith.constant 0 : index
    %c4 = arith.constant 4 : index
    %c0_34 = arith.constant 0 : index
    %c0_35 = arith.constant 0 : index
    %32 = vector.load %arg5[%c0_33, %c4, %c0_34, %c0_35] : memref<1x5x8x128xf32, #tpu.memory_space<vmem>>, vector<1x1x8x128xf32>
    %33 = vector.shape_cast %32 : vector<1x1x8x128xf32> to vector<8x128xf32>
    %34 = arith.addf %33, %7#4 : vector<8x128xf32>
    %c0_36 = arith.constant 0 : index
    %c4_37 = arith.constant 4 : index
    %c0_38 = arith.constant 0 : index
    %c0_39 = arith.constant 0 : index
    %35 = vector.load %arg5[%c0_36, %c4_37, %c0_38, %c0_39] : memref<1x5x8x128xf32, #tpu.memory_space<vmem>>, vector<1x1x8x128xf32>
    %36 = vector.shape_cast %35 : vector<1x1x8x128xf32> to vector<8x128xf32>
    %37 = vector.shape_cast %34 : vector<8x128xf32> to vector<1x1x8x128xf32>
    tpu.vector_store %arg5[%c0_36, %c4_37, %c0_38, %c0_39], %37 {strides = array<i32>} : memref<1x5x8x128xf32, #tpu.memory_space<vmem>>, vector<1x1x8x128xf32>,
    return
  }
  func.func @transform_0(%arg0: i32, %arg1: i32) -> i32 {
    %c0_i32 = arith.constant 0 : i32
    %c0_i32_0 = arith.constant 0 : i32
    return %c0_i32 : i32
  }
  func.func @transform_1(%arg0: i32, %arg1: i32) -> (i32, i32) {
    %c1_i32 = arith.constant 1 : i32
    %0 = arith.muli %arg0, %c1_i32 : i32
    %1 = arith.addi %0, %arg1 : i32
    %c0_i32 = arith.constant 0 : i32
    %2 = arith.minsi %1, %c0_i32 : i32
    %c0_i32_0 = arith.constant 0 : i32
    %c0_i32_1 = arith.constant 0 : i32
    return %2, %c0_i32_0 : i32, i32
  }
  func.func @transform_2(%arg0: i32, %arg1: i32) -> (i32, i32) {
    %c1_i32 = arith.constant 1 : i32
    %0 = arith.muli %arg0, %c1_i32 : i32
    %1 = arith.addi %0, %arg1 : i32
    %c0_i32 = arith.constant 0 : i32
    %2 = arith.minsi %1, %c0_i32 : i32
    %c0_i32_0 = arith.constant 0 : i32
    %c0_i32_1 = arith.constant 0 : i32
    return %2, %c0_i32_0 : i32, i32
  }
  func.func @transform_3(%arg0: i32, %arg1: i32) -> (i32, i32, i32, i32) {
    %c0_i32 = arith.constant 0 : i32
    %c0_i32_0 = arith.constant 0 : i32
    %c0_i32_1 = arith.constant 0 : i32
    %c0_i32_2 = arith.constant 0 : i32
    return %arg0, %c0_i32, %c0_i32_0, %c0_i32_1 : i32, i32, i32, i32
  }
}

</mosaic_0001>

<llo_original>
// kernel: ccc_loss.1
$region0: #{ccc_loss.1}
  #allocation0 [shape = 'u32[]', space=smem, size = 0x4, offset = 0x4, fixed_abs, tag = 'smem constant byte address 0x4 - core index']
  #allocation1 [shape = 'u32[72,128]{1,0:T(1,128)}', space=vmem, size = 0x9000, scoped, tag = 'internal scratch']
  %s0 = inlined_call_operand.vmem [shape: f32[2], index: 0, kind: input, shape index: {}]
  %s1 = inlined_call_operand.hbm [shape: f32[1024,128], index: 1, kind: input, shape index: {}]
  %s2 = inlined_call_operand.hbm [shape: f32[1024,128], index: 2, kind: input, shape index: {}]
  %s3 = inlined_call_operand.vmem [shape: f32[1,5,8,128], index: 3, kind: output, shape index: {}]
  %s4 = sld [smem:[#allocation0]]
  $region45: #{ccc_loss.1} parent=0
    _
  %s6 = ssub.s32 1, %s4
  %s7 = scalar_select 0, %s6, %s4
  $region1: #{ccc_loss.1} parent=0
    #allocation2 [shape = 'u8[512]{0}', space=smem, size = 0x200, scoped, tag = 'input window, operand 0, single buffered']
    #allocation3 [shape = 's32[1]{0}', space=sflag, size = 0x4, scoped, tag = 'scoped memory for ccc_loss.1']
    #allocation4 [shape = 's32[1]{0}', space=sflag, size = 0x4, scoped, tag = 'scoped memory for ccc_loss.1']
    #allocation5 [shape = 'u8[524288]{0}', space=vmem, size = 0x80000, scoped, tag = 'input window, operand 1, single buffered']
    #allocation6 [shape = 'u8[524288]{0}', space=vmem, size = 0x80000, scoped, tag = 'input window, operand 2, single buffered']
    #allocation7 [shape = 's32[1]{0}', space=sflag, size = 0x4, scoped, tag = 'scoped memory for ccc_loss.1']
    %8 = vsyncpa [#allocation4], 0
    %9 = vsyncpa [#allocation3], 0
    %10 = vsyncpa [#allocation7], 0
    // Predicated region
    $region2: #{ccc_loss.1} parent=1 // pred_check
      _
    $region3: #{ccc_loss.1} parent=1 // pred_check_branch
      %12 = sbr.rel (0) target = $region5
    $region4: #{ccc_loss.1} parent=1 // pred_region
      %14 = vsyncadd [#allocation4], 0
      %s16 = sshll.u32 %s0, 4
      %s17 = int_to_ptr.vmem [resolvable:$true] %s16
      %19 = dma.vmem_to_smem %s17, 16, [#allocation2], [#allocation4]
    $region5: #{ccc_loss.1} parent=1 // pred_fallthru
      _
    // Predicated region
    $region6: #{ccc_loss.1} parent=1 // pred_check
      _
    $region7: #{ccc_loss.1} parent=1 // pred_check_branch
      %21 = sbr.rel (0) target = $region9
    $region8: #{ccc_loss.1} parent=1 // pred_region
      %s22 = sadd.s32 0, 0
      %p23 = scmp.lt.s32.totalorder %s22, 0
      %s24 = scalar_select %p23, %s22, 0
      %s25 = smul.u32 128, %s24
      %27 = vsyncadd [#allocation3], 0
      %s28 = smul.addr %s25, 8
      %s29 = scalar_lea.hbm %s1, %s28
      %s30 = sshll.u32 %s29, 4
      %s31 = int_to_ptr.hbm [resolvable:$true] %s30
      %s32 = sshll.u32 [#allocation5], 4
      %s33 = int_to_ptr.vmem [resolvable:$true] %s32
      %38 = dma.hbm_to_vmem [thread:$0]  %s31, 16384, %s33, [#allocation3], 128, 128, 8
    $region9: #{ccc_loss.1} parent=1 // pred_fallthru
      _
    // Predicated region
    $region10: #{ccc_loss.1} parent=1 // pred_check
      _
    $region11: #{ccc_loss.1} parent=1 // pred_check_branch
      %40 = sbr.rel (0) target = $region13
    $region12: #{ccc_loss.1} parent=1 // pred_region
      %s41 = sadd.s32 0, 0
      %p42 = scmp.lt.s32.totalorder %s41, 0
      %s43 = scalar_select %p42, %s41, 0
      %s44 = smul.u32 128, %s43
      %46 = vsyncadd [#allocation7], 0
      %s47 = smul.addr %s44, 8
      %s48 = scalar_lea.hbm %s2, %s47
      %s49 = sshll.u32 %s48, 4
      %s50 = int_to_ptr.hbm [resolvable:$true] %s49
      %s51 = sshll.u32 [#allocation6], 4
      %s52 = int_to_ptr.vmem [resolvable:$true] %s51
      %57 = dma.hbm_to_vmem [thread:$0]  %s50, 16384, %s52, [#allocation7], 128, 128, 8
    $region13: #{ccc_loss.1} parent=1 // pred_fallthru
      _
    // Predicated region
    $region14: #{ccc_loss.1} parent=1 // pred_check
      _
    $region15: #{ccc_loss.1} parent=1 // pred_check_branch
      %59 = sbr.rel (0) target = $region17
    $region16: #{ccc_loss.1} parent=1 // pred_region
      %61 = dma.done [#allocation4], 16
    $region17: #{ccc_loss.1} parent=1 // pred_fallthru
      _
    // Predicated region
    $region18: #{ccc_loss.1} parent=1 // pred_check
      _
    $region19: #{ccc_loss.1} parent=1 // pred_check_branch
      %63 = sbr.rel (0) target = $region21
    $region20: #{ccc_loss.1} parent=1 // pred_region
      %65 = dma.done [#allocation3], 16384
    $region21: #{ccc_loss.1} parent=1 // pred_fallthru
      _
    // Predicated region
    $region22: #{ccc_loss.1} parent=1 // pred_check
      _
    $region23: #{ccc_loss.1} parent=1 // pred_check_branch
      %67 = sbr.rel (0) target = $region25
    $region24: #{ccc_loss.1} parent=1 // pred_region
      %69 = dma.done [#allocation7], 16384
    $region25: #{ccc_loss.1} parent=1 // pred_fallthru
      _
    %70 = sfence
    %s71 = sadd.s32 0, 0
    %p72 = scmp.lt.s32.totalorder %s71, 0
    %s73 = scalar_select %p72, %s71, 0
    %s74 = smul.u32 128, %s73
    %s75 = sadd.s32 0, 0
    %p76 = scmp.lt.s32.totalorder %s75, 0
    %s77 = scalar_select %p76, %s75, 0
    %s78 = smul.u32 128, %s77
    %p79 = scmp.eq.s32.totalorder 0, 0
    // Predicated region
    $region26: #{ccc_loss.1} parent=1 // pred_check
      %p80 = pneg %p79
    $region27: #{ccc_loss.1} parent=1 // pred_check_branch
      %82 = sbr.rel (%p80) target = $region29
    $region28: #{ccc_loss.1} parent=1 // pred_region
      %83 = vst [vmem:[%s3] sm:$0xff] 0.0
      %84 = vst [vmem:[%s3 + $0x8] sm:$0xff] 0.0
      %85 = vst [vmem:[%s3 + $0x10] sm:$0xff] 0.0
      %86 = vst [vmem:[%s3 + $0x18] sm:$0xff] 0.0
      %87 = vst [vmem:[%s3 + $0x20] sm:$0xff] 0.0
    $region29: #{ccc_loss.1} parent=1 // pred_fallthru
      _
    %s88 = sld [smem:[#allocation2]]
    %s89 = sld [smem:[#allocation2 + $0x1]]
    loop: start=0, step=1, limit=16
    $region30: #{ccc_loss.1} parent=1 // loop_pre_header
      _
    $region31: #{ccc_loss.1} parent=1 // loop_header
      %s91 = sphi 0, %s95
      %p92 = scmp.ge.s32.totalorder %s91, 16
      %v96 = vphi 0.0, %v145
      %v97 = vphi 0.0, %v153
      %v98 = vphi 0.0, %v169
      %v99 = vphi 0.0, %v185
      %v100 = vphi 0.0, %v201
    $region32: #{ccc_loss.1} parent=1 // loop_header_branch
      %94 = sbr.rel (%p92) target = $region36
    $region33: #{ccc_loss.1} parent=1 // loop_body
      %s101 = smul.u32 %s91, 64
      %s102 = scalar_lea.vmem [#allocation5], %s101
      %v103 = vld [vmem:[%s102] sm:$0xff]
      %v104 = vld [vmem:[%s102 + $0x8] sm:$0xff]
      %v105 = vld [vmem:[%s102 + $0x10] sm:$0xff]
      %v106 = vld [vmem:[%s102 + $0x18] sm:$0xff]
      %v107 = vld [vmem:[%s102 + $0x20] sm:$0xff]
      %v108 = vld [vmem:[%s102 + $0x28] sm:$0xff]
      %v109 = vld [vmem:[%s102 + $0x30] sm:$0xff]
      %v110 = vld [vmem:[%s102 + $0x38] sm:$0xff]
      %v111 = vstv %s88
      %v112 = vsub.f32 %v103, %v111
      %v113 = vsub.f32 %v104, %v111
      %v114 = vsub.f32 %v105, %v111
      %v115 = vsub.f32 %v106, %v111
      %v116 = vsub.f32 %v107, %v111
      %v117 = vsub.f32 %v108, %v111
      %v118 = vsub.f32 %v109, %v111
      %v119 = vsub.f32 %v110, %v111
      %s120 = scalar_lea.vmem [#allocation6], %s101
      %v121 = vld [vmem:[%s120] sm:$0xff]
      %v122 = vld [vmem:[%s120 + $0x8] sm:$0xff]
      %v123 = vld [vmem:[%s120 + $0x10] sm:$0xff]
      %v124 = vld [vmem:[%s120 + $0x18] sm:$0xff]
      %v125 = vld [vmem:[%s120 + $0x20] sm:$0xff]
      %v126 = vld [vmem:[%s120 + $0x28] sm:$0xff]
      %v127 = vld [vmem:[%s120 + $0x30] sm:$0xff]
      %v128 = vld [vmem:[%s120 + $0x38] sm:$0xff]
      %v129 = vstv %s89
      %v130 = vsub.f32 %v121, %v129
      %v131 = vsub.f32 %v122, %v129
      %v132 = vsub.f32 %v123, %v129
      %v133 = vsub.f32 %v124, %v129
      %v134 = vsub.f32 %v125, %v129
      %v135 = vsub.f32 %v126, %v129
      %v136 = vsub.f32 %v127, %v129
      %v137 = vsub.f32 %v128, %v129
      %v138 = vadd.f32 %v112, %v113
      %v139 = vadd.f32 %v138, %v114
      %v140 = vadd.f32 %v139, %v115
      %v141 = vadd.f32 %v140, %v116
      %v142 = vadd.f32 %v141, %v117
      %v143 = vadd.f32 %v142, %v118
      %v144 = vadd.f32 %v143, %v119
      %v145 = vadd.f32 %v96, %v144
      %v146 = vadd.f32 %v130, %v131
      %v147 = vadd.f32 %v146, %v132
      %v148 = vadd.f32 %v147, %v133
      %v149 = vadd.f32 %v148, %v134
      %v150 = vadd.f32 %v149, %v135
      %v151 = vadd.f32 %v150, %v136
      %v152 = vadd.f32 %v151, %v137
      %v153 = vadd.f32 %v97, %v152
      %v154 = vmul.f32 %v112, %v130
      %v155 = vmul.f32 %v113, %v131
      %v156 = vmul.f32 %v114, %v132
      %v157 = vmul.f32 %v115, %v133
      %v158 = vmul.f32 %v116, %v134
      %v159 = vmul.f32 %v117, %v135
      %v160 = vmul.f32 %v118, %v136
      %v161 = vmul.f32 %v119, %v137
      %v162 = vadd.f32 %v154, %v155
      %v163 = vadd.f32 %v162, %v156
      %v164 = vadd.f32 %v163, %v157
      %v165 = vadd.f32 %v164, %v158
      %v166 = vadd.f32 %v165, %v159
      %v167 = vadd.f32 %v166, %v160
      %v168 = vadd.f32 %v167, %v161
      %v169 = vadd.f32 %v98, %v168
      %v170 = vmul.f32 %v112, %v112
      %v171 = vmul.f32 %v113, %v113
      %v172 = vmul.f32 %v114, %v114
      %v173 = vmul.f32 %v115, %v115
      %v174 = vmul.f32 %v116, %v116
      %v175 = vmul.f32 %v117, %v117
      %v176 = vmul.f32 %v118, %v118
      %v177 = vmul.f32 %v119, %v119
      %v178 = vadd.f32 %v170, %v171
      %v179 = vadd.f32 %v178, %v172
      %v180 = vadd.f32 %v179, %v173
      %v181 = vadd.f32 %v180, %v174
      %v182 = vadd.f32 %v181, %v175
      %v183 = vadd.f32 %v182, %v176
      %v184 = vadd.f32 %v183, %v177
      %v185 = vadd.f32 %v99, %v184
      %v186 = vmul.f32 %v130, %v130
      %v187 = vmul.f32 %v131, %v131
      %v188 = vmul.f32 %v132, %v132
      %v189 = vmul.f32 %v133, %v133
      %v190 = vmul.f32 %v134, %v134
      %v191 = vmul.f32 %v135, %v135
      %v192 = vmul.f32 %v136, %v136
      %v193 = vmul.f32 %v137, %v137
      %v194 = vadd.f32 %v186, %v187
      %v195 = vadd.f32 %v194, %v188
      %v196 = vadd.f32 %v195, %v189
      %v197 = vadd.f32 %v196, %v190
      %v198 = vadd.f32 %v197, %v191
      %v199 = vadd.f32 %v198, %v192
      %v200 = vadd.f32 %v199, %v193
      %v201 = vadd.f32 %v100, %v200
    $region34: #{ccc_loss.1} parent=1 // loop_footer
      %s95 = sadd.s32 1, %s91
    $region35: #{ccc_loss.1} parent=1 // loop_footer_branch
      %90 = sbr.rel target = $region31
    $region36: #{ccc_loss.1} parent=1 // loop_exit
      _
    %v202 = vld [vmem:[%s3] sm:$0xff]
    %v203 = vadd.f32 %v202, %v96
    %204 = vst [vmem:[%s3] sm:$0xff] %v203
    %s205 = scalar_lea.vmem %s3, 8
    %v206 = vld [vmem:[%s205] sm:$0xff]
    %v207 = vadd.f32 %v206, %v97
    %208 = vst [vmem:[%s205] sm:$0xff] %v207
    %s209 = scalar_lea.vmem %s3, 16
    %v210 = vld [vmem:[%s209] sm:$0xff]
    %v211 = vadd.f32 %v210, %v98
    %212 = vst [vmem:[%s209] sm:$0xff] %v211
    %s213 = scalar_lea.vmem %s3, 24
    %v214 = vld [vmem:[%s213] sm:$0xff]
    %v215 = vadd.f32 %v214, %v99
    %216 = vst [vmem:[%s213] sm:$0xff] %v215
    %s217 = scalar_lea.vmem %s3, 32
    %v218 = vld [vmem:[%s217] sm:$0xff]
    %v219 = vadd.f32 %v218, %v100
    %220 = vst [vmem:[%s217] sm:$0xff] %v219
    // Predicated region
    $region37: #{ccc_loss.1} parent=1 // pred_check
      _
    $region38: #{ccc_loss.1} parent=1 // pred_check_branch
      %222 = sbr.rel (0) target = $region40
    $region39: #{ccc_loss.1} parent=1 // pred_region
      _
    $region40: #{ccc_loss.1} parent=1 // pred_fallthru
      _
    // Predicated region
    $region41: #{ccc_loss.1} parent=1 // pred_check
      _
    $region42: #{ccc_loss.1} parent=1 // pred_check_branch
      %224 = sbr.rel (0) target = $region44
    $region43: #{ccc_loss.1} parent=1 // pred_region
      _
    $region44: #{ccc_loss.1} parent=1 // pred_fallthru
      _
    %225 = vsyncpa [#allocation3], 1
    %226 = vsyncpa [#allocation7], 1
    %227 = vsyncpa [#allocation4], 1

</llo_original>
